<compile_context>
chip_gen: v7x
topology: tpu7x:2x2x1
jax: 0.10.0
libtpu: 0.0.40
codegen_flags: <defaults>
</compile_context>

<pallas_src>
import functools
import math

import jax
import jax.numpy as jnp
from jax.experimental import pallas as pl
from jax.experimental.pallas import tpu as pltpu


LANE = 128     # TPU lane width (last dim)
SUBLANE = 8    # f32 sublane width (second-to-last dim)


def _round_up(x, m):
    return (x + m - 1) // m * m


# ---------------------------------------------------------------------------
# Fused kernel: [relu(x @ W_i + b_i)]*L  ->  log_softmax (masked, padded lanes)
# ---------------------------------------------------------------------------
def _mlp_fused_kernel(*refs, n_layers, n_out_true, compute_dtype):
    # refs = (x_ref, w0, b0, w1, b1, ..., w_{L-1}, b_{L-1}, o_ref)
    x_ref = refs[0]
    o_ref = refs[-1]
    wb = refs[1:-1]

    h = x_ref[...].astype(jnp.float32)
    for i in range(n_layers):
        w = wb[2 * i][...]
        b = wb[2 * i + 1][...].astype(jnp.float32)      # (1, n_out_pad), broadcasts
        # bf16 MXU inputs, f32 accumulation (preferred_element_type).
        y = jnp.dot(h.astype(compute_dtype), w.astype(compute_dtype),
                    preferred_element_type=jnp.float32)
        # relu(fc(x)); the module's extra relu on hidden layers is idempotent,
        # so a single relu reproduces it exactly. Padded lanes stay exactly 0
        # (zero W rows/cols, zero bias), so they feed 0 into the next layer.
        h = jnp.maximum(y + b, 0.0)

    # log_softmax over the *true* output features: padded lanes are masked to
    # -inf so exp(pad)=0 never corrupts the normalizer.
    lane_idx = jax.lax.broadcasted_iota(jnp.int32, h.shape, dimension=1)
    valid = lane_idx < n_out_true
    logits = jnp.where(valid, h, -jnp.inf)
    m = jnp.max(logits, axis=-1, keepdims=True)
    s = logits - m
    lse = jnp.log(jnp.sum(jnp.exp(s), axis=-1, keepdims=True))
    out = s - lse
    out = jnp.where(valid, out, 0.0)          # don't store -inf in padded lanes
    o_ref[...] = out.astype(o_ref.dtype)


# ---------------------------------------------------------------------------
# Parameter init (matches nn.Linear: U(-1/sqrt(n_in), 1/sqrt(n_in)))
# ---------------------------------------------------------------------------
def init_mlp_params(layer_sizes, key):
    params = []
    for n_in, n_out in zip(layer_sizes[:-1], layer_sizes[1:]):
        key, kw, kb = jax.random.split(key, 3)
        bound = 1.0 / math.sqrt(n_in)
        # Stored as (n_in, n_out) == PyTorch weight.T, so the kernel does x @ W.
        w = jax.random.uniform(kw, (n_in, n_out), jnp.float32, -bound, bound)
        b = jax.random.uniform(kb, (1, n_out), jnp.float32, -bound, bound)
        params.append((w, b))
    return params


# ---------------------------------------------------------------------------
# Wrapper: pad to lane-dense shapes, single fused pallas_call, slice back
# ---------------------------------------------------------------------------
def mlp_forward(params, x, *, block_m=256, compute_dtype=jnp.bfloat16):
    batch, n_in0 = x.shape
    layer_sizes = [params[0][0].shape[0]] + [w.shape[1] for (w, _) in params]
    assert n_in0 == layer_sizes[0]

    padded = [_round_up(d, LANE) for d in layer_sizes]
    n_out_true = layer_sizes[-1]
    n_out_pad = padded[-1]

    # Batch tile: multiple of 8 (f32 sublane), capped so that (x tile + out
    # tile) double-buffered plus resident weights stays well under the v7x
    # 64 MiB VMEM / 32 MiB scoped default.
    tm = min(block_m, _round_up(batch, SUBLANE))
    tm = _round_up(tm, SUBLANE)
    batch_pad = _round_up(batch, tm)
    grid_m = batch_pad // tm

    # Zero-pad input (batch rows + feature lanes).
    x_p = jnp.pad(x, ((0, batch_pad - batch), (0, padded[0] - layer_sizes[0])))

    # Zero-pad weights / biases to lane-dense shapes; they stay VMEM-resident
    # across the batch grid (constant index_map).
    flat_wb = []
    in_specs = [pl.BlockSpec((tm, padded[0]), lambda i: (i, 0))]
    for li, (w, b) in enumerate(params):
        n_in, n_out = w.shape
        pin, pout = padded[li], padded[li + 1]
        w_p = jnp.pad(w, ((0, pin - n_in), (0, pout - n_out)))
        b_p = jnp.pad(b.reshape(1, -1), ((0, 0), (0, pout - n_out)))
        flat_wb += [w_p, b_p]
        in_specs += [
            pl.BlockSpec((pin, pout), lambda i: (0, 0)),
            pl.BlockSpec((1, pout), lambda i: (0, 0)),
        ]

    # NOTE: if a hidden dim ever outgrows a single K block, add a trailing
    # "arbitrary" K grid axis with a VMEM f32 accumulator instead of growing
    # the resident weight block.
    kernel = functools.partial(
        _mlp_fused_kernel,
        n_layers=len(params),
        n_out_true=n_out_true,
        compute_dtype=compute_dtype,
    )

    out_p = pl.pallas_call(
        kernel,
        out_shape=jax.ShapeDtypeStruct((batch_pad, n_out_pad), x.dtype),
        grid=(grid_m,),
        in_specs=in_specs,
        out_specs=pl.BlockSpec((tm, n_out_pad), lambda i: (i, 0)),
        compiler_params=pltpu.CompilerParams(
            dimension_semantics=("parallel",),   # v7x: shard batch across 2 TCs
        ),
    )(x_p, *flat_wb)

    # Strip batch/lane padding (cheap XLA slice).
    return out_p[:batch, :n_out_true]


if __name__ == "__main__":
    layer_sizes = [16, 32, 10]
    batch = 8

    key = jax.random.PRNGKey(0)
    key_params, key_x = jax.random.split(key)

    params = init_mlp_params(layer_sizes, key_params)
    x = jax.random.normal(key_x, (batch, layer_sizes[0]), dtype=jnp.float32)

    out = mlp_forward(params, x)
    out = jax.block_until_ready(out)

    assert out.shape == (batch, layer_sizes[-1])
    # log_softmax rows must sum to ~1 in prob space.
    assert bool(jnp.allclose(jnp.sum(jnp.exp(out), axis=-1), 1.0, atol=1e-3))

    # Cross-check against a pure-JAX f32 reference (kernel matmuls are bf16
    # with f32 accumulation, so use a loose tolerance).
    ref = x
    for w, b in params:
        ref = jnp.maximum(ref @ w + b, 0.0)
    ref = jax.nn.log_softmax(ref, axis=-1)
    assert bool(jnp.allclose(out, ref, atol=5e-2, rtol=5e-2))

    print("KERNEL_OK")
</pallas_src>

<mosaic_0001>
module attributes {stable_mosaic.version = 11 : i64} {
  func.func @_mlp_fused_kernel(%arg0: i32, %arg1: memref<8x128xf32, #tpu.memory_space<vmem>>, %arg2: memref<128x128xf32, #tpu.memory_space<vmem>>, %arg3: memref<1x128xf32, #tpu.memory_space<vmem>>, %arg4: memref<128x128xf32, #tpu.memory_space<vmem>>, %arg5: memref<1x128xf32, #tpu.memory_space<vmem>>, %arg6: memref<8x128xf32, #tpu.memory_space<vmem>>) attributes {dimension_semantics = [#tpu.dimension_semantics<parallel>], iteration_bounds = array<i64: 1>, scalar_prefetch = 0 : i64, scratch_operands = 0 : i64, tpu.core_type = #tpu.core_type<tc>, window_params = [{transform_indices = @transform_0, window_bounds = array<i64: 8, 128>}, {pipeline_mode = #tpu.pipeline_mode<synchronous>, transform_indices = @transform_1, window_bounds = array<i64: 128, 128>}, {pipeline_mode = #tpu.pipeline_mode<synchronous>, transform_indices = @transform_2, window_bounds = array<i64: 1, 128>}, {pipeline_mode = #tpu.pipeline_mode<synchronous>, transform_indices = @transform_3, window_bounds = array<i64: 128, 128>}, {pipeline_mode = #tpu.pipeline_mode<synchronous>, transform_indices = @transform_4, window_bounds = array<i64: 1, 128>}, {transform_indices = @transform_5, window_bounds = array<i64: 8, 128>}]} {
    %c0 = arith.constant 0 : index
    %c0_0 = arith.constant 0 : index
    %0 = vector.load %arg1[%c0, %c0_0] : memref<8x128xf32, #tpu.memory_space<vmem>>, vector<8x128xf32>
    %c0_1 = arith.constant 0 : index
    %c0_2 = arith.constant 0 : index
    %1 = vector.load %arg2[%c0_1, %c0_2] : memref<128x128xf32, #tpu.memory_space<vmem>>, vector<128x128xf32>
    %c0_3 = arith.constant 0 : index
    %c0_4 = arith.constant 0 : index
    %2 = vector.load %arg3[%c0_3, %c0_4] : memref<1x128xf32, #tpu.memory_space<vmem>>, vector<1x128xf32>
    %3 = arith.truncf %0 : vector<8x128xf32> to vector<8x128xbf16>
    %4 = arith.truncf %1 : vector<128x128xf32> to vector<128x128xbf16>
    %cst = arith.constant dense<0.000000e+00> : vector<8x128xf32>
    %5 = tpu.matmul %3, %4, %cst {dimension_numbers = #tpu.dot_dimension_numbers<[1], [0], [0], [1], [0, 0, 1, 1], [], []>} : vector<8x128xbf16>, vector<128x128xbf16>, vector<8x128xf32> -> vector<8x128xf32>
    %6 = vector.broadcast %2 : vector<1x128xf32> to vector<8x128xf32>
    %7 = arith.addf %5, %6 : vector<8x128xf32>
    %cst_5 = arith.constant 0.000000e+00 : f32
    %8 = vector.broadcast %cst_5 : f32 to vector<8x128xf32>
    %9 = arith.maximumf %7, %8 : vector<8x128xf32>
    %c0_6 = arith.constant 0 : index
    %c0_7 = arith.constant 0 : index
    %10 = vector.load %arg4[%c0_6, %c0_7] : memref<128x128xf32, #tpu.memory_space<vmem>>, vector<128x128xf32>
    %c0_8 = arith.constant 0 : index
    %c0_9 = arith.constant 0 : index
    %11 = vector.load %arg5[%c0_8, %c0_9] : memref<1x128xf32, #tpu.memory_space<vmem>>, vector<1x128xf32>
    %12 = arith.truncf %9 : vector<8x128xf32> to vector<8x128xbf16>
    %13 = arith.truncf %10 : vector<128x128xf32> to vector<128x128xbf16>
    %cst_10 = arith.constant dense<0.000000e+00> : vector<8x128xf32>
    %14 = tpu.matmul %12, %13, %cst_10 {dimension_numbers = #tpu.dot_dimension_numbers<[1], [0], [0], [1], [0, 0, 1, 1], [], []>} : vector<8x128xbf16>, vector<128x128xbf16>, vector<8x128xf32> -> vector<8x128xf32>
    %15 = vector.broadcast %11 : vector<1x128xf32> to vector<8x128xf32>
    %16 = arith.addf %14, %15 : vector<8x128xf32>
    %cst_11 = arith.constant 0.000000e+00 : f32
    %17 = vector.broadcast %cst_11 : f32 to vector<8x128xf32>
    %18 = arith.maximumf %16, %17 : vector<8x128xf32>
    %19 = tpu.iota {dimensions = array<i32: 1>} : vector<8x128xi32>
    %c10_i32 = arith.constant 10 : i32
    %20 = vector.broadcast %c10_i32 : i32 to vector<8x128xi32>
    %21 = arith.cmpi slt, %19, %20 : vector<8x128xi32>
    %cst_12 = arith.constant 0xFF800000 : f32
    %22 = vector.broadcast %cst_12 : f32 to vector<8x128xf32>
    %23 = arith.select %21, %18, %22 : vector<8x128xi1>, vector<8x128xf32>
    %cst_13 = arith.constant dense<0xFF800000> : vector<8xf32>
    %24 = vector.multi_reduction <maximumf>, %23, %cst_13 [1] : vector<8x128xf32> to vector<8xf32>
    %25 = vector.shape_cast %24 : vector<8xf32> to vector<8x1xf32>
    %26 = vector.broadcast %25 : vector<8x1xf32> to vector<8x128xf32>
    %27 = arith.subf %23, %26 : vector<8x128xf32>
    %28 = math.exp %27 : vector<8x128xf32>
    %cst_14 = arith.constant dense<0.000000e+00> : vector<8xf32>
    %29 = vector.multi_reduction <add>, %28, %cst_14 [1] : vector<8x128xf32> to vector<8xf32>
    %30 = vector.shape_cast %29 : vector<8xf32> to vector<8x1xf32>
    %31 = math.log %30 : vector<8x1xf32>
    %32 = vector.broadcast %31 : vector<8x1xf32> to vector<8x128xf32>
    %33 = arith.subf %27, %32 : vector<8x128xf32>
    %cst_15 = arith.constant 0.000000e+00 : f32
    %34 = vector.broadcast %cst_15 : f32 to vector<8x128xf32>
    %35 = arith.select %21, %33, %34 : vector<8x128xi1>, vector<8x128xf32>
    %c0_16 = arith.constant 0 : index
    %c0_17 = arith.constant 0 : index
    %36 = vector.load %arg6[%c0_16, %c0_17] : memref<8x128xf32, #tpu.memory_space<vmem>>, vector<8x128xf32>
    tpu.vector_store %arg6[%c0_16, %c0_17], %35 {strides = array<i32>} : memref<8x128xf32, #tpu.memory_space<vmem>>, vector<8x128xf32>,
    return
  }
  func.func @transform_0(%arg0: i32) -> (i32, i32) {
    %c0_i32 = arith.constant 0 : i32
    %c0_i32_0 = arith.constant 0 : i32
    return %arg0, %c0_i32 : i32, i32
  }
  func.func @transform_1(%arg0: i32) -> (i32, i32) {
    %c0_i32 = arith.constant 0 : i32
    %c0_i32_0 = arith.constant 0 : i32
    %c0_i32_1 = arith.constant 0 : i32
    return %c0_i32, %c0_i32_0 : i32, i32
  }
  func.func @transform_2(%arg0: i32) -> (i32, i32) {
    %c0_i32 = arith.constant 0 : i32
    %c0_i32_0 = arith.constant 0 : i32
    %c0_i32_1 = arith.constant 0 : i32
    return %c0_i32, %c0_i32_0 : i32, i32
  }
  func.func @transform_3(%arg0: i32) -> (i32, i32) {
    %c0_i32 = arith.constant 0 : i32
    %c0_i32_0 = arith.constant 0 : i32
    %c0_i32_1 = arith.constant 0 : i32
    return %c0_i32, %c0_i32_0 : i32, i32
  }
  func.func @transform_4(%arg0: i32) -> (i32, i32) {
    %c0_i32 = arith.constant 0 : i32
    %c0_i32_0 = arith.constant 0 : i32
    %c0_i32_1 = arith.constant 0 : i32
    return %c0_i32, %c0_i32_0 : i32, i32
  }
  func.func @transform_5(%arg0: i32) -> (i32, i32) {
    %c0_i32 = arith.constant 0 : i32
    %c0_i32_0 = arith.constant 0 : i32
    return %arg0, %c0_i32 : i32, i32
  }
}

</mosaic_0001>

<llo_original>
// kernel: tpu_custom_call.1
$region0: #{tpu_custom_call.1}
  #allocation0 [shape = 'u32[]', space=smem, size = 0x4, offset = 0x4, fixed_abs, tag = 'smem constant byte address 0x4 - core index']
  #allocation1 [shape = 'u32[144,128]{1,0:T(1,128)}', space=vmem, size = 0x12000, scoped, tag = 'internal scratch']
  %s0 = inlined_call_operand.hbm [shape: f32[8,128], index: 0, kind: input, shape index: {}]
  %s1 = inlined_call_operand.hbm [shape: f32[128,128], index: 1, kind: input, shape index: {}]
  %s2 = inlined_call_operand.vmem [shape: f32[1,128], index: 2, kind: input, shape index: {}]
  %s3 = inlined_call_operand.hbm [shape: f32[128,128], index: 3, kind: input, shape index: {}]
  %s4 = inlined_call_operand.vmem [shape: f32[1,128], index: 4, kind: input, shape index: {}]
  %s5 = inlined_call_operand.hbm [shape: f32[8,128], index: 5, kind: output, shape index: {}]
  %s6 = sld [smem:[#allocation0]]
  $region42: #{tpu_custom_call.1} parent=0
    _
  %s8 = ssub.s32 1, %s6
  %s9 = scalar_select 0, %s8, %s6
  $region1: #{tpu_custom_call.1} parent=0
    #allocation2 [shape = 'u8[4096]{0}', space=vmem, size = 0x1000, scoped, tag = 'input window, operand 0, single buffered']
    #allocation3 [shape = 's32[1]{0}', space=sflag, size = 0x4, scoped, tag = 'scoped memory for tpu_custom_call.1']
    #allocation4 [shape = 's32[1]{0}', space=sflag, size = 0x4, scoped, tag = 'scoped memory for tpu_custom_call.1']
    #allocation5 [shape = 'u8[65536]{0}', space=vmem, size = 0x10000, scoped, tag = 'input window, operand 1, single buffered']
    #allocation6 [shape = 's32[1]{0}', space=sflag, size = 0x4, scoped, tag = 'scoped memory for tpu_custom_call.1']
    #allocation7 [shape = 'u8[65536]{0}', space=vmem, size = 0x10000, scoped, tag = 'input window, operand 3, single buffered']
    #allocation8 [shape = 'u8[4096]{0}', space=vmem, size = 0x1000, scoped, tag = 'output window, operand 0, single buffered']
    %10 = vsyncpa [#allocation3], 0
    %11 = vsyncpa [#allocation6], 0
    %12 = vsyncpa [#allocation4], 0
    // Predicated region
    $region2: #{tpu_custom_call.1} parent=1 // pred_check
      _
    $region3: #{tpu_custom_call.1} parent=1 // pred_check_branch
      %14 = sbr.rel (0) target = $region5
    $region4: #{tpu_custom_call.1} parent=1 // pred_region
      %s16 = ssub.s32 128, 128
      %17 = vsyncadd [#allocation3], %s16
      %s19 = sshll.u32 [#allocation2], 4
      %s20 = int_to_ptr.vmem [resolvable:$true] %s19
      %22 = dma.hbm_to_vmem [thread:$0]  %s0, 128, %s20, [#allocation3]
    $region5: #{tpu_custom_call.1} parent=1 // pred_fallthru
      _
    // Predicated region
    $region6: #{tpu_custom_call.1} parent=1 // pred_check
      _
    $region7: #{tpu_custom_call.1} parent=1 // pred_check_branch
      %24 = sbr.rel (0) target = $region9
    $region8: #{tpu_custom_call.1} parent=1 // pred_region
      %s26 = ssub.s32 2048, 2048
      %27 = vsyncadd [#allocation6], %s26
      %s28 = sshll.u32 [#allocation5], 4
      %s29 = int_to_ptr.vmem [resolvable:$true] %s28
      %34 = dma.hbm_to_vmem [thread:$0]  %s1, 2048, %s29, [#allocation6], 128, 128, 8
    $region9: #{tpu_custom_call.1} parent=1 // pred_fallthru
      _
    // Predicated region
    $region10: #{tpu_custom_call.1} parent=1 // pred_check
      _
    $region11: #{tpu_custom_call.1} parent=1 // pred_check_branch
      %36 = sbr.rel (0) target = $region13
    $region12: #{tpu_custom_call.1} parent=1 // pred_region
      _
    $region13: #{tpu_custom_call.1} parent=1 // pred_fallthru
      _
    // Predicated region
    $region14: #{tpu_custom_call.1} parent=1 // pred_check
      _
    $region15: #{tpu_custom_call.1} parent=1 // pred_check_branch
      %38 = sbr.rel (0) target = $region17
    $region16: #{tpu_custom_call.1} parent=1 // pred_region
      %s40 = ssub.s32 2048, 2048
      %41 = vsyncadd [#allocation6], %s40
      %s42 = sshll.u32 [#allocation7], 4
      %s43 = int_to_ptr.vmem [resolvable:$true] %s42
      %48 = dma.hbm_to_vmem [thread:$0]  %s3, 2048, %s43, [#allocation6], 128, 128, 8
    $region17: #{tpu_custom_call.1} parent=1 // pred_fallthru
      _
    // Predicated region
    $region18: #{tpu_custom_call.1} parent=1 // pred_check
      _
    $region19: #{tpu_custom_call.1} parent=1 // pred_check_branch
      %50 = sbr.rel (0) target = $region21
    $region20: #{tpu_custom_call.1} parent=1 // pred_region
      _
    $region21: #{tpu_custom_call.1} parent=1 // pred_fallthru
      _
    // Predicated region
    $region22: #{tpu_custom_call.1} parent=1 // pred_check
      _
    $region23: #{tpu_custom_call.1} parent=1 // pred_check_branch
      %52 = sbr.rel (0) target = $region25
    $region24: #{tpu_custom_call.1} parent=1 // pred_region
      %53 = dma.done [#allocation3], 128
    $region25: #{tpu_custom_call.1} parent=1 // pred_fallthru
      _
    // Predicated region
    $region26: #{tpu_custom_call.1} parent=1 // pred_check
      _
    $region27: #{tpu_custom_call.1} parent=1 // pred_check_branch
      %55 = sbr.rel (0) target = $region29
    $region28: #{tpu_custom_call.1} parent=1 // pred_region
      %56 = dma.done [#allocation6], 2048
    $region29: #{tpu_custom_call.1} parent=1 // pred_fallthru
      _
    // Predicated region
    $region30: #{tpu_custom_call.1} parent=1 // pred_check
      _
    $region31: #{tpu_custom_call.1} parent=1 // pred_check_branch
      %58 = sbr.rel (0) target = $region33
    $region32: #{tpu_custom_call.1} parent=1 // pred_region
      %59 = dma.done [#allocation6], 2048
    $region33: #{tpu_custom_call.1} parent=1 // pred_fallthru
      _
    %v61 = vld [vmem:[#allocation2] sm:$0xff]
    %v62 = vld [vmem:[#allocation5] sm:$0xff]
    %v63 = vld [vmem:[#allocation5 + $0x8] sm:$0xff]
    %v64 = vld [vmem:[#allocation5 + $0x10] sm:$0xff]
    %v65 = vld [vmem:[#allocation5 + $0x18] sm:$0xff]
    %v66 = vld [vmem:[#allocation5 + $0x20] sm:$0xff]
    %v67 = vld [vmem:[#allocation5 + $0x28] sm:$0xff]
    %v68 = vld [vmem:[#allocation5 + $0x30] sm:$0xff]
    %v69 = vld [vmem:[#allocation5 + $0x38] sm:$0xff]
    %v70 = vld [vmem:[#allocation5 + $0x40] sm:$0xff]
    %v71 = vld [vmem:[#allocation5 + $0x48] sm:$0xff]
    %v72 = vld [vmem:[#allocation5 + $0x50] sm:$0xff]
    %v73 = vld [vmem:[#allocation5 + $0x58] sm:$0xff]
    %v74 = vld [vmem:[#allocation5 + $0x60] sm:$0xff]
    %v75 = vld [vmem:[#allocation5 + $0x68] sm:$0xff]
    %v76 = vld [vmem:[#allocation5 + $0x70] sm:$0xff]
    %v77 = vld [vmem:[#allocation5 + $0x78] sm:$0xff]
    %v78 = vld [vmem:[%s2] sm:$0x1]
    %v79 = vpack.c.bf16 %v61, %v61
    %v80 = vpack.c.bf16 %v63, %v62
    %v81 = vpack.c.bf16 %v65, %v64
    %v82 = vpack.c.bf16 %v67, %v66
    %v83 = vpack.c.bf16 %v69, %v68
    %v84 = vpack.c.bf16 %v71, %v70
    %v85 = vpack.c.bf16 %v73, %v72
    %v86 = vpack.c.bf16 %v75, %v74
    %v87 = vpack.c.bf16 %v77, %v76
    %v89 = vlaneseq
    %v90 = vshrl.u32 %v89, 7
    %v91 = vsub.s32 0, %v90
    %v92 = vrot.slane %v78, %v91
    %94 = vmatprep.subr.bf16.mxu0 0
    %95 = vmatpush1.bf16.msra.mxu0 %v80
    %96 = vmatprep.subr.bf16.mxu0 0
    %97 = vmatpush1.bf16.msra.mxu0 %v81
    %98 = vmatprep.subr.bf16.mxu0 0
    %99 = vmatpush1.bf16.msra.mxu0 %v82
    %100 = vmatprep.subr.bf16.mxu0 0
    %101 = vmatpush1.bf16.msra.mxu0 %v83
    %102 = vmatprep.subr.bf16.mxu0 0
    %103 = vmatpush1.bf16.msra.mxu0 %v84
    %104 = vmatprep.subr.bf16.mxu0 0
    %105 = vmatpush1.bf16.msra.mxu0 %v85
    %106 = vmatprep.subr.bf16.mxu0 0
    %107 = vmatpush1.bf16.msra.mxu0 %v86
    %108 = vmatprep.subr.bf16.mxu0 0
    %109 = vmatpush1.bf16.msra.mxu0 %v87
    %110 = vmatprep.subr.bf16.mxu0 0
    %111 = vmatpush1.bf16.msra.mxu0 0
    %112 = vmatprep.subr.bf16.mxu0 0
    %113 = vmatpush1.bf16.msra.mxu0 0
    %114 = vmatprep.subr.bf16.mxu0 0
    %115 = vmatpush1.bf16.msra.mxu0 0
    %116 = vmatprep.subr.bf16.mxu0 0
    %117 = vmatpush1.bf16.msra.mxu0 0
    %118 = vmatprep.subr.bf16.mxu0 0
    %119 = vmatpush1.bf16.msra.mxu0 0
    %120 = vmatprep.subr.bf16.mxu0 0
    %121 = vmatpush1.bf16.msra.mxu0 0
    %122 = vmatprep.subr.bf16.mxu0 0
    %123 = vmatpush1.bf16.msra.mxu0 0
    %124 = vmatprep.subr.bf16.mxu0 0
    %125 = vmatpush1.bf16.msra.mxu0 0
    %126 = vmatprep.mubr.bf16.mxu0 0
    %127 = vmatmul.mubr.bf16.gmra.mrb[0].mxu0 %v79
    %v128 = vpop.f32.mrb[0].mxu0
    %v129 = vadd.f32 %v92, %v128
    %v130 = vpop.f32.mrb[0].mxu0
    %v131 = vpop.f32.mrb[0].mxu0
    %v132 = vpop.f32.mrb[0].mxu0
    %133 = vdwg.mxu0
    %v134 = vmax.f32 %v129, 0.0
    %v135 = vld [vmem:[#allocation7] sm:$0xff]
    %v136 = vld [vmem:[#allocation7 + $0x8] sm:$0xff]
    %v137 = vld [vmem:[#allocation7 + $0x10] sm:$0xff]
    %v138 = vld [vmem:[#allocation7 + $0x18] sm:$0xff]
    %v139 = vld [vmem:[#allocation7 + $0x20] sm:$0xff]
    %v140 = vld [vmem:[#allocation7 + $0x28] sm:$0xff]
    %v141 = vld [vmem:[#allocation7 + $0x30] sm:$0xff]
    %v142 = vld [vmem:[#allocation7 + $0x38] sm:$0xff]
    %v143 = vld [vmem:[#allocation7 + $0x40] sm:$0xff]
    %v144 = vld [vmem:[#allocation7 + $0x48] sm:$0xff]
    %v145 = vld [vmem:[#allocation7 + $0x50] sm:$0xff]
    %v146 = vld [vmem:[#allocation7 + $0x58] sm:$0xff]
    %v147 = vld [vmem:[#allocation7 + $0x60] sm:$0xff]
    %v148 = vld [vmem:[#allocation7 + $0x68] sm:$0xff]
    %v149 = vld [vmem:[#allocation7 + $0x70] sm:$0xff]
    %v150 = vld [vmem:[#allocation7 + $0x78] sm:$0xff]
    %v151 = vld [vmem:[%s4] sm:$0x1]
    %v152 = vpack.c.bf16 %v134, %v134
    %v153 = vpack.c.bf16 %v136, %v135
    %v154 = vpack.c.bf16 %v138, %v137
    %v155 = vpack.c.bf16 %v140, %v139
    %v156 = vpack.c.bf16 %v142, %v141
    %v157 = vpack.c.bf16 %v144, %v143
    %v158 = vpack.c.bf16 %v146, %v145
    %v159 = vpack.c.bf16 %v148, %v147
    %v160 = vpack.c.bf16 %v150, %v149
    %v162 = vlaneseq
    %v163 = vshrl.u32 %v162, 7
    %v164 = vsub.s32 0, %v163
    %v165 = vrot.slane %v151, %v164
    %167 = vmatprep.subr.bf16.mxu0 0
    %168 = vmatpush1.bf16.msra.mxu0 %v153
    %169 = vmatprep.subr.bf16.mxu0 0
    %170 = vmatpush1.bf16.msra.mxu0 %v154
    %171 = vmatprep.subr.bf16.mxu0 0
    %172 = vmatpush1.bf16.msra.mxu0 %v155
    %173 = vmatprep.subr.bf16.mxu0 0
    %174 = vmatpush1.bf16.msra.mxu0 %v156
    %175 = vmatprep.subr.bf16.mxu0 0
    %176 = vmatpush1.bf16.msra.mxu0 %v157
    %177 = vmatprep.subr.bf16.mxu0 0
    %178 = vmatpush1.bf16.msra.mxu0 %v158
    %179 = vmatprep.subr.bf16.mxu0 0
    %180 = vmatpush1.bf16.msra.mxu0 %v159
    %181 = vmatprep.subr.bf16.mxu0 0
    %182 = vmatpush1.bf16.msra.mxu0 %v160
    %183 = vmatprep.subr.bf16.mxu0 0
    %184 = vmatpush1.bf16.msra.mxu0 0
    %185 = vmatprep.subr.bf16.mxu0 0
    %186 = vmatpush1.bf16.msra.mxu0 0
    %187 = vmatprep.subr.bf16.mxu0 0
    %188 = vmatpush1.bf16.msra.mxu0 0
    %189 = vmatprep.subr.bf16.mxu0 0
    %190 = vmatpush1.bf16.msra.mxu0 0
    %191 = vmatprep.subr.bf16.mxu0 0
    %192 = vmatpush1.bf16.msra.mxu0 0
    %193 = vmatprep.subr.bf16.mxu0 0
    %194 = vmatpush1.bf16.msra.mxu0 0
    %195 = vmatprep.subr.bf16.mxu0 0
    %196 = vmatpush1.bf16.msra.mxu0 0
    %197 = vmatprep.subr.bf16.mxu0 0
    %198 = vmatpush1.bf16.msra.mxu0 0
    %199 = vmatprep.mubr.bf16.mxu0 0
    %200 = vmatmul.mubr.bf16.gmra.mrb[0].mxu0 %v152
    %v201 = vpop.f32.mrb[0].mxu0
    %v202 = vadd.f32 %v165, %v201
    %v203 = vpop.f32.mrb[0].mxu0
    %v204 = vpop.f32.mrb[0].mxu0
    %v205 = vpop.f32.mrb[0].mxu0
    %206 = vdwg.mxu0
    %v207 = vmax.f32 %v202, 0.0
    %v208 = vlaneseq
    %v209 = vand.u32 %v208, 127
    %vm210 = vcmp.lt.s32.totalorder %v209, 10
    %v211 = vsel %vm210, %v207, -inf
    %212 = vmax.xlane.f32.xlu0 %v211
    %v213 = vpop.xlane.xlu0 %212
    %v214 = vsub.f32 %v211, %v213
    %v215 = vmul.f32 %v214, 1.442695
    %v216 = vpow.pop %v215
    %217 = vadd.xlane.f32.xlu0 %v216
    %v218 = vpop.xlane.xlu0 %217
    %v219 = vlog2.pop %v218
    %v220 = vmul.f32 %v219, 0.6931472
    %v221 = vsub.f32 %v214, %v220
    %v222 = vsel %vm210, %v221, 0.0
    %223 = vst [vmem:[#allocation8] sm:$0xff] %v222
    // Predicated region
    $region34: #{tpu_custom_call.1} parent=1 // pred_check
      _
    $region35: #{tpu_custom_call.1} parent=1 // pred_check_branch
      %225 = sbr.rel (0) target = $region37
    $region36: #{tpu_custom_call.1} parent=1 // pred_region
      %s227 = ssub.s32 128, 128
      %228 = vsyncadd [#allocation4], %s227
      %s230 = sshll.u32 [#allocation8], 4
      %s231 = int_to_ptr.vmem [resolvable:$true] %s230
      %233 = dma.vmem_to_hbm [thread:$0]  %s231, 128, %s5, [#allocation4]
    $region37: #{tpu_custom_call.1} parent=1 // pred_fallthru
      _
    // Predicated region
    $region38: #{tpu_custom_call.1} parent=1 // pred_check
      _
    $region39: #{tpu_custom_call.1} parent=1 // pred_check_branch
      %235 = sbr.rel (0) target = $region41
    $region40: #{tpu_custom_call.1} parent=1 // pred_region
      %236 = dma.done [#allocation4], 128
    $region41: #{tpu_custom_call.1} parent=1 // pred_fallthru
      _
    %237 = vsyncpa [#allocation3], 1
    %238 = vsyncpa [#allocation6], 1
    %239 = vsyncpa [#allocation4], 1

</llo_original>
